<compile_context>
chip_gen: v7x
topology: tpu7x:2x2x1
jax: 0.10.0
libtpu: 0.0.40
codegen_flags: <defaults>
</compile_context>

<pallas_src>
import functools

import jax
import jax.numpy as jnp
from jax.experimental import pallas as pl
from jax.experimental.pallas import tpu as pltpu

NUM_FEATURES = 16
HIDDEN1 = 128
HIDDEN2 = 64
HIDDEN2_PAD = 128          # layer-2 width zero-padded to a full 128-lane tile
NUM_CLASSES = 16           # len(genre_to_class)
BN_EPS = 1e-5
LEAKY_SLOPE = 0.01         # nn.LeakyReLU default negative_slope
MAX_BLOCK_B = 2048         # batch-tile cap (multiple of 256)


def _round_up(x, m):
    return -(-x // m) * m


def _pick_block_b(batch):
    """Batch tile: as large as practical (amortizes the ~0.35us per-grid-step
    overhead), a multiple of 256 for the 256-wide MXU on v6e/v7x, while keeping
    >=2 grid iterations for non-tiny batches so v7x's two TensorCores are both
    used.  Small batches use a single exact-size block (multiple of 8)."""
    if batch <= 256:
        return _round_up(batch, 8)
    return min(MAX_BLOCK_B, _round_up(-(-batch // 2), 256))


def _leaky_relu(x):
    return jnp.where(x > 0, x, LEAKY_SLOPE * x)


# ----------------------------- Pallas kernel -------------------------------

def mlp_kernel(x_ref, w1_ref, b1_ref, w2_ref, b2_ref, w3_ref, b3_ref, o_ref):
    # BN/bias folding happened at parameter-prep time, so the body is just
    # dot -> leaky_relu -> dot -> leaky_relu -> dot -> sigmoid.
    # Accumulate in f32 (preferred_element_type); elementwise math stays f32
    # (v5e has no bf16 VPU/EUP); activations cast to the weight dtype per dot.
    x = x_ref[...].astype(w1_ref.dtype)              # in-kernel cast (VPU slack)
    h = jnp.dot(x, w1_ref[...], preferred_element_type=jnp.float32)
    h = _leaky_relu(h + b1_ref[...])

    h = jnp.dot(h.astype(w2_ref.dtype), w2_ref[...],
                preferred_element_type=jnp.float32)
    h = _leaky_relu(h + b2_ref[...])

    h = jnp.dot(h.astype(w3_ref.dtype), w3_ref[...],
                preferred_element_type=jnp.float32)
    h = h + b3_ref[...]

    # Exact sigmoid: 1 / (1 + exp(-h)).  approx=False per the correctness
    # review; the kernel is HBM-bound so the exact reciprocal is free.
    o_ref[...] = pl.reciprocal(1.0 + jnp.exp(-h), approx=False).astype(o_ref.dtype)


# ------------------------------ wrapper -------------------------------------

@functools.partial(jax.jit, static_argnames=("out_dtype",))
def mlp_forward(x, folded, out_dtype=jnp.bfloat16):
    """x: (B, 16) float32.  Returns sigmoid probabilities, shape (B, 16)."""
    w1, b1, w2, b2, w3, b3 = folded
    batch = x.shape[0]
    block_b = _pick_block_b(batch)
    grid = (pl.cdiv(batch, block_b),)

    return pl.pallas_call(
        mlp_kernel,
        out_shape=jax.ShapeDtypeStruct((batch, NUM_CLASSES), out_dtype),
        grid=grid,
        in_specs=[
            pl.BlockSpec((block_b, NUM_FEATURES), lambda i: (i, 0)),    # x tile
            pl.BlockSpec((NUM_FEATURES, HIDDEN1), lambda i: (0, 0)),    # w1 (resident)
            pl.BlockSpec((1, HIDDEN1), lambda i: (0, 0)),               # b1
            pl.BlockSpec((HIDDEN1, HIDDEN2_PAD), lambda i: (0, 0)),     # w2 (padded)
            pl.BlockSpec((1, HIDDEN2_PAD), lambda i: (0, 0)),           # b2 (padded)
            pl.BlockSpec((HIDDEN2_PAD, NUM_CLASSES), lambda i: (0, 0)), # w3 (padded rows)
            pl.BlockSpec((1, NUM_CLASSES), lambda i: (0, 0)),           # b3
        ],
        out_specs=pl.BlockSpec((block_b, NUM_CLASSES), lambda i: (i, 0)),
        compiler_params=pltpu.CompilerParams(
            dimension_semantics=("parallel",)),                          # 2 TCs on v7x
    )(x, w1, b1, w2, b2, w3, b3)


# ------------------------- parameter preparation ----------------------------

def _bn_affine(gamma, beta, mean, var):
    """eval-mode BatchNorm1d(x) == x * scale + shift."""
    scale = gamma / jnp.sqrt(var + BN_EPS)
    return scale, beta - mean * scale


def fold_params(raw, matmul_dtype=jnp.bfloat16):
    """Fold bn0/bn1/bn2 + biases into the linear weights and zero-pad the
    hidden2 width (64 -> 128).  Folding is done in f32; a single cast to
    `matmul_dtype` (bf16 on the perf path) happens at the end.

      layer1(x) = leaky(x @ w1 + b1)   == leaky(bn1(fc1(bn0(x))))
      layer2(h) = leaky(h @ w2 + b2)   == leaky(bn2(fc2(h)))   (padded to 128)
      layer3(h) = sigmoid(h @ w3 + b3)
    """
    s0, t0 = _bn_affine(*raw["bn0"])
    s1, t1 = _bn_affine(*raw["bn1"])
    s2, t2 = _bn_affine(*raw["bn2"])

    w1, c1 = raw["fc1"]             # PyTorch layout (out, in)
    w2, c2 = raw["fc2"]
    w3, c3 = raw["out"]
    w1, w2, w3 = w1.T, w2.T, w3.T   # -> (in, out): kernel computes x @ W

    w1f = (s0[:, None] * w1) * s1[None, :]
    b1f = (t0 @ w1 + c1) * s1 + t1
    w2f = w2 * s2[None, :]
    b2f = c2 * s2 + t2

    # Zero-pad hidden2 64 -> 128: padded columns produce leaky(0)=0 and hit
    # zero rows of w3, so the result is unchanged.
    w2p = jnp.zeros((HIDDEN1, HIDDEN2_PAD), jnp.float32).at[:, :HIDDEN2].set(w2f)
    b2p = jnp.zeros((HIDDEN2_PAD,), jnp.float32).at[:HIDDEN2].set(b2f)
    w3p = jnp.zeros((HIDDEN2_PAD, NUM_CLASSES), jnp.float32).at[:HIDDEN2, :].set(w3)

    return (w1f.astype(matmul_dtype), b1f.reshape(1, -1).astype(jnp.float32),
            w2p.astype(matmul_dtype), b2p.reshape(1, -1).astype(jnp.float32),
            w3p.astype(matmul_dtype), c3.reshape(1, -1).astype(jnp.float32))


def init_raw_params(key):
    """Deterministic synthetic parameters matching the nn.Module shapes
    (PyTorch layout), with distinct PRNG keys for every tensor."""
    ks = jax.random.split(key, 18)

    def linear(kw, kb, fan_in, fan_out):
        bound = 1.0 / jnp.sqrt(jnp.float32(fan_in))
        w = jax.random.uniform(kw, (fan_out, fan_in), jnp.float32, -bound, bound)
        b = jax.random.uniform(kb, (fan_out,), jnp.float32, -bound, bound)
        return w, b

    def bn(kg, kb, km, kv, n):
        gamma = 1.0 + 0.1 * jax.random.normal(kg, (n,), jnp.float32)
        beta = 0.1 * jax.random.normal(kb, (n,), jnp.float32)
        mean = 0.1 * jax.random.normal(km, (n,), jnp.float32)
        var = jnp.abs(1.0 + 0.1 * jax.random.normal(kv, (n,), jnp.float32))
        return gamma, beta, mean, var

    return {
        "bn0": bn(ks[0], ks[1], ks[2], ks[3], NUM_FEATURES),
        "fc1": linear(ks[4], ks[5], NUM_FEATURES, HIDDEN1),
        "bn1": bn(ks[6], ks[7], ks[8], ks[9], HIDDEN1),
        "fc2": linear(ks[10], ks[11], HIDDEN1, HIDDEN2),
        "bn2": bn(ks[12], ks[13], ks[14], ks[15], HIDDEN2),
        "out": linear(ks[16], ks[17], HIDDEN2, NUM_CLASSES),
    }


# --------------------------- pure-JAX reference ------------------------------

def reference_forward(x, raw):
    """Eval-mode forward identical to the PyTorch module (dropout = identity)."""
    def bn(h, stats):
        gamma, beta, mean, var = stats
        return (h - mean) / jnp.sqrt(var + BN_EPS) * gamma + beta

    w1, b1 = raw["fc1"]
    w2, b2 = raw["fc2"]
    w3, b3 = raw["out"]

    h = bn(x, raw["bn0"])
    h = h @ w1.T + b1
    h = _leaky_relu(bn(h, raw["bn1"]))
    h = h @ w2.T + b2
    h = _leaky_relu(bn(h, raw["bn2"]))
    h = h @ w3.T + b3
    return jax.nn.sigmoid(h)


# --------------------------------- main --------------------------------------

if __name__ == "__main__":
    key = jax.random.PRNGKey(0)
    k_x1, k_x2, k_x3, k_p = jax.random.split(key, 4)
    raw = init_raw_params(k_p)

    folded_f32 = fold_params(raw, matmul_dtype=jnp.float32)
    folded_bf16 = fold_params(raw, matmul_dtype=jnp.bfloat16)

    # 1) f32 weights / f32 output: parity check vs the pure-JAX reference.
    x_small = jax.random.normal(k_x1, (8, NUM_FEATURES), jnp.float32)
    out_f32 = jax.block_until_ready(
        mlp_forward(x_small, folded_f32, out_dtype=jnp.float32))
    ref_small = reference_forward(x_small, raw)
    assert out_f32.shape == (8, NUM_CLASSES)
    assert jnp.allclose(out_f32, ref_small, atol=5e-3, rtol=0.0), "f32 mismatch"

    # 2) bf16 perf path (default), single block (batch 200).
    x_mid = jax.random.normal(k_x2, (200, NUM_FEATURES), jnp.float32)
    out_mid = jax.block_until_ready(mlp_forward(x_mid, folded_bf16))
    ref_mid = reference_forward(x_mid, raw)
    assert out_mid.shape == (200, NUM_CLASSES) and out_mid.dtype == jnp.bfloat16
    assert jnp.allclose(out_mid.astype(jnp.float32), ref_mid,
                        atol=2.5e-2, rtol=0.0), "bf16 mismatch"

    # 3) bf16 perf path, multi-block grid with a ragged last block
    #    (600 rows -> BLOCK_B=512 -> blocks of 512 + 88).
    x_big = jax.random.normal(k_x3, (600, NUM_FEATURES), jnp.float32)
    out_big = jax.block_until_ready(mlp_forward(x_big, folded_bf16))
    ref_big = reference_forward(x_big, raw)
    assert out_big.shape == (600, NUM_CLASSES)
    assert jnp.allclose(out_big.astype(jnp.float32), ref_big,
                        atol=2.5e-2, rtol=0.0), "bf16 ragged-block mismatch"

    print("KERNEL_OK")
</pallas_src>

<mosaic_0001>
module attributes {stable_mosaic.version = 11 : i64} {
  func.func @mlp_kernel(%arg0: i32, %arg1: memref<8x16xf32, #tpu.memory_space<vmem>>, %arg2: memref<16x128xf32, #tpu.memory_space<vmem>>, %arg3: memref<1x128xf32, #tpu.memory_space<vmem>>, %arg4: memref<128x128xf32, #tpu.memory_space<vmem>>, %arg5: memref<1x128xf32, #tpu.memory_space<vmem>>, %arg6: memref<128x16xf32, #tpu.memory_space<vmem>>, %arg7: memref<1x16xf32, #tpu.memory_space<vmem>>, %arg8: memref<8x16xf32, #tpu.memory_space<vmem>>) attributes {dimension_semantics = [#tpu.dimension_semantics<parallel>], iteration_bounds = array<i64: 1>, scalar_prefetch = 0 : i64, scratch_operands = 0 : i64, tpu.core_type = #tpu.core_type<tc>, window_params = [{transform_indices = @transform_0, window_bounds = array<i64: 8, 16>}, {pipeline_mode = #tpu.pipeline_mode<synchronous>, transform_indices = @transform_1, window_bounds = array<i64: 16, 128>}, {pipeline_mode = #tpu.pipeline_mode<synchronous>, transform_indices = @transform_2, window_bounds = array<i64: 1, 128>}, {pipeline_mode = #tpu.pipeline_mode<synchronous>, transform_indices = @transform_3, window_bounds = array<i64: 128, 128>}, {pipeline_mode = #tpu.pipeline_mode<synchronous>, transform_indices = @transform_4, window_bounds = array<i64: 1, 128>}, {pipeline_mode = #tpu.pipeline_mode<synchronous>, transform_indices = @transform_5, window_bounds = array<i64: 128, 16>}, {pipeline_mode = #tpu.pipeline_mode<synchronous>, transform_indices = @transform_6, window_bounds = array<i64: 1, 16>}, {transform_indices = @transform_7, window_bounds = array<i64: 8, 16>}]} {
    %c0 = arith.constant 0 : index
    %c0_0 = arith.constant 0 : index
    %0 = vector.load %arg1[%c0, %c0_0] : memref<8x16xf32, #tpu.memory_space<vmem>>, vector<8x16xf32>
    %c0_1 = arith.constant 0 : index
    %c0_2 = arith.constant 0 : index
    %1 = vector.load %arg2[%c0_1, %c0_2] : memref<16x128xf32, #tpu.memory_space<vmem>>, vector<16x128xf32>
    %cst = arith.constant dense<0.000000e+00> : vector<8x128xf32>
    %2 = tpu.matmul %0, %1, %cst {dimension_numbers = #tpu.dot_dimension_numbers<[1], [0], [0], [1], [0, 0, 1, 1], [], []>} : vector<8x16xf32>, vector<16x128xf32>, vector<8x128xf32> -> vector<8x128xf32>
    %c0_3 = arith.constant 0 : index
    %c0_4 = arith.constant 0 : index
    %3 = vector.load %arg3[%c0_3, %c0_4] : memref<1x128xf32, #tpu.memory_space<vmem>>, vector<1x128xf32>
    %4 = vector.broadcast %3 : vector<1x128xf32> to vector<8x128xf32>
    %5 = arith.addf %2, %4 : vector<8x128xf32>
    %cst_5 = arith.constant 0.000000e+00 : f32
    %6 = vector.broadcast %cst_5 : f32 to vector<8x128xf32>
    %7 = arith.cmpf ogt, %5, %6 : vector<8x128xf32>
    %cst_6 = arith.constant 0.00999999977 : f32
    %8 = vector.broadcast %cst_6 : f32 to vector<8x128xf32>
    %9 = arith.mulf %8, %5 : vector<8x128xf32>
    %10 = arith.select %7, %5, %9 : vector<8x128xi1>, vector<8x128xf32>
    %c0_7 = arith.constant 0 : index
    %c0_8 = arith.constant 0 : index
    %11 = vector.load %arg4[%c0_7, %c0_8] : memref<128x128xf32, #tpu.memory_space<vmem>>, vector<128x128xf32>
    %cst_9 = arith.constant dense<0.000000e+00> : vector<8x128xf32>
    %12 = tpu.matmul %10, %11, %cst_9 {dimension_numbers = #tpu.dot_dimension_numbers<[1], [0], [0], [1], [0, 0, 1, 1], [], []>} : vector<8x128xf32>, vector<128x128xf32>, vector<8x128xf32> -> vector<8x128xf32>
    %c0_10 = arith.constant 0 : index
    %c0_11 = arith.constant 0 : index
    %13 = vector.load %arg5[%c0_10, %c0_11] : memref<1x128xf32, #tpu.memory_space<vmem>>, vector<1x128xf32>
    %14 = vector.broadcast %13 : vector<1x128xf32> to vector<8x128xf32>
    %15 = arith.addf %12, %14 : vector<8x128xf32>
    %cst_12 = arith.constant 0.000000e+00 : f32
    %16 = vector.broadcast %cst_12 : f32 to vector<8x128xf32>
    %17 = arith.cmpf ogt, %15, %16 : vector<8x128xf32>
    %cst_13 = arith.constant 0.00999999977 : f32
    %18 = vector.broadcast %cst_13 : f32 to vector<8x128xf32>
    %19 = arith.mulf %18, %15 : vector<8x128xf32>
    %20 = arith.select %17, %15, %19 : vector<8x128xi1>, vector<8x128xf32>
    %c0_14 = arith.constant 0 : index
    %c0_15 = arith.constant 0 : index
    %21 = vector.load %arg6[%c0_14, %c0_15] : memref<128x16xf32, #tpu.memory_space<vmem>>, vector<128x16xf32>
    %cst_16 = arith.constant dense<0.000000e+00> : vector<8x16xf32>
    %22 = tpu.matmul %20, %21, %cst_16 {dimension_numbers = #tpu.dot_dimension_numbers<[1], [0], [0], [1], [0, 0, 1, 1], [], []>} : vector<8x128xf32>, vector<128x16xf32>, vector<8x16xf32> -> vector<8x16xf32>
    %c0_17 = arith.constant 0 : index
    %c0_18 = arith.constant 0 : index
    %23 = vector.load %arg7[%c0_17, %c0_18] : memref<1x16xf32, #tpu.memory_space<vmem>>, vector<1x16xf32>
    %24 = vector.broadcast %23 : vector<1x16xf32> to vector<8x16xf32>
    %25 = arith.addf %22, %24 : vector<8x16xf32>
    %cst_19 = arith.constant 0.000000e+00 : f32
    %26 = vector.broadcast %cst_19 : f32 to vector<8x16xf32>
    %27 = arith.subf %26, %25 : vector<8x16xf32>
    %28 = math.exp %27 : vector<8x16xf32>
    %cst_20 = arith.constant 1.000000e+00 : f32
    %29 = vector.broadcast %cst_20 : f32 to vector<8x16xf32>
    %30 = arith.addf %29, %28 : vector<8x16xf32>
    %31 = tpu.reciprocal %30 : vector<8x16xf32> -> vector<8x16xf32>
    %c0_21 = arith.constant 0 : index
    %c0_22 = arith.constant 0 : index
    %32 = vector.load %arg8[%c0_21, %c0_22] : memref<8x16xf32, #tpu.memory_space<vmem>>, vector<8x16xf32>
    tpu.vector_store %arg8[%c0_21, %c0_22], %31 {strides = array<i32>} : memref<8x16xf32, #tpu.memory_space<vmem>>, vector<8x16xf32>,
    return
  }
  func.func @transform_0(%arg0: i32) -> (i32, i32) {
    %c0_i32 = arith.constant 0 : i32
    %c0_i32_0 = arith.constant 0 : i32
    return %arg0, %c0_i32 : i32, i32
  }
  func.func @transform_1(%arg0: i32) -> (i32, i32) {
    %c0_i32 = arith.constant 0 : i32
    %c0_i32_0 = arith.constant 0 : i32
    %c0_i32_1 = arith.constant 0 : i32
    return %c0_i32, %c0_i32_0 : i32, i32
  }
  func.func @transform_2(%arg0: i32) -> (i32, i32) {
    %c0_i32 = arith.constant 0 : i32
    %c0_i32_0 = arith.constant 0 : i32
    %c0_i32_1 = arith.constant 0 : i32
    return %c0_i32, %c0_i32_0 : i32, i32
  }
  func.func @transform_3(%arg0: i32) -> (i32, i32) {
    %c0_i32 = arith.constant 0 : i32
    %c0_i32_0 = arith.constant 0 : i32
    %c0_i32_1 = arith.constant 0 : i32
    return %c0_i32, %c0_i32_0 : i32, i32
  }
  func.func @transform_4(%arg0: i32) -> (i32, i32) {
    %c0_i32 = arith.constant 0 : i32
    %c0_i32_0 = arith.constant 0 : i32
    %c0_i32_1 = arith.constant 0 : i32
    return %c0_i32, %c0_i32_0 : i32, i32
  }
  func.func @transform_5(%arg0: i32) -> (i32, i32) {
    %c0_i32 = arith.constant 0 : i32
    %c0_i32_0 = arith.constant 0 : i32
    %c0_i32_1 = arith.constant 0 : i32
    return %c0_i32, %c0_i32_0 : i32, i32
  }
  func.func @transform_6(%arg0: i32) -> (i32, i32) {
    %c0_i32 = arith.constant 0 : i32
    %c0_i32_0 = arith.constant 0 : i32
    %c0_i32_1 = arith.constant 0 : i32
    return %c0_i32, %c0_i32_0 : i32, i32
  }
  func.func @transform_7(%arg0: i32) -> (i32, i32) {
    %c0_i32 = arith.constant 0 : i32
    %c0_i32_0 = arith.constant 0 : i32
    return %arg0, %c0_i32 : i32, i32
  }
}

</mosaic_0001>

<llo_original>
// kernel: mlp_forward.1
$region0: #{mlp_forward.1}
  #allocation0 [shape = 'u32[]', space=smem, size = 0x4, offset = 0x4, fixed_abs, tag = 'smem constant byte address 0x4 - core index']
  #allocation1 [shape = 'u32[144,128]{1,0:T(1,128)}', space=vmem, size = 0x12000, scoped, tag = 'internal scratch']
  %s0 = inlined_call_operand.hbm [shape: f32[8,16], index: 0, kind: input, shape index: {}]
  %s1 = inlined_call_operand.vmem [shape: f32[16,128], index: 1, kind: input, shape index: {}]
  %s2 = inlined_call_operand.vmem [shape: f32[1,128], index: 2, kind: input, shape index: {}]
  %s3 = inlined_call_operand.vmem [shape: f32[128,128], index: 3, kind: input, shape index: {}]
  %s4 = inlined_call_operand.vmem [shape: f32[1,128], index: 4, kind: input, shape index: {}]
  %s5 = inlined_call_operand.vmem [shape: f32[128,16], index: 5, kind: input, shape index: {}]
  %s6 = inlined_call_operand.vmem [shape: f32[1,16], index: 6, kind: input, shape index: {}]
  %s7 = inlined_call_operand.hbm [shape: f32[8,16], index: 7, kind: output, shape index: {}]
  %s8 = sld [smem:[#allocation0]]
  $region42: #{mlp_forward.1} parent=0
    _
  %s10 = ssub.s32 1, %s8
  %s11 = scalar_select 0, %s10, %s8
  $region1: #{mlp_forward.1} parent=0
    #allocation2 [shape = 'u8[4096]{0}', space=vmem, size = 0x1000, scoped, tag = 'input window, operand 0, single buffered']
    #allocation3 [shape = 's32[1]{0}', space=sflag, size = 0x4, scoped, tag = 'scoped memory for mlp_forward.1']
    #allocation4 [shape = 's32[1]{0}', space=sflag, size = 0x4, scoped, tag = 'scoped memory for mlp_forward.1']
    #allocation5 [shape = 'u8[4096]{0}', space=vmem, size = 0x1000, scoped, tag = 'output window, operand 0, single buffered']
    %12 = vsyncpa [#allocation3], 0
    %13 = vsyncpa [#allocation4], 0
    // Predicated region
    $region2: #{mlp_forward.1} parent=1 // pred_check
      _
    $region3: #{mlp_forward.1} parent=1 // pred_check_branch
      %15 = sbr.rel (0) target = $region5
    $region4: #{mlp_forward.1} parent=1 // pred_region
      %s17 = ssub.s32 128, 128
      %18 = vsyncadd [#allocation3], %s17
      %s20 = sshll.u32 [#allocation2], 4
      %s21 = int_to_ptr.vmem [resolvable:$true] %s20
      %23 = dma.hbm_to_vmem [thread:$0]  %s0, 128, %s21, [#allocation3]
    $region5: #{mlp_forward.1} parent=1 // pred_fallthru
      _
    // Predicated region
    $region6: #{mlp_forward.1} parent=1 // pred_check
      _
    $region7: #{mlp_forward.1} parent=1 // pred_check_branch
      %25 = sbr.rel (0) target = $region9
    $region8: #{mlp_forward.1} parent=1 // pred_region
      _
    $region9: #{mlp_forward.1} parent=1 // pred_fallthru
      _
    // Predicated region
    $region10: #{mlp_forward.1} parent=1 // pred_check
      _
    $region11: #{mlp_forward.1} parent=1 // pred_check_branch
      %27 = sbr.rel (0) target = $region13
    $region12: #{mlp_forward.1} parent=1 // pred_region
      _
    $region13: #{mlp_forward.1} parent=1 // pred_fallthru
      _
    // Predicated region
    $region14: #{mlp_forward.1} parent=1 // pred_check
      _
    $region15: #{mlp_forward.1} parent=1 // pred_check_branch
      %29 = sbr.rel (0) target = $region17
    $region16: #{mlp_forward.1} parent=1 // pred_region
      _
    $region17: #{mlp_forward.1} parent=1 // pred_fallthru
      _
    // Predicated region
    $region18: #{mlp_forward.1} parent=1 // pred_check
      _
    $region19: #{mlp_forward.1} parent=1 // pred_check_branch
      %31 = sbr.rel (0) target = $region21
    $region20: #{mlp_forward.1} parent=1 // pred_region
      _
    $region21: #{mlp_forward.1} parent=1 // pred_fallthru
      _
    // Predicated region
    $region22: #{mlp_forward.1} parent=1 // pred_check
      _
    $region23: #{mlp_forward.1} parent=1 // pred_check_branch
      %33 = sbr.rel (0) target = $region25
    $region24: #{mlp_forward.1} parent=1 // pred_region
      _
    $region25: #{mlp_forward.1} parent=1 // pred_fallthru
      _
    // Predicated region
    $region26: #{mlp_forward.1} parent=1 // pred_check
      _
    $region27: #{mlp_forward.1} parent=1 // pred_check_branch
      %35 = sbr.rel (0) target = $region29
    $region28: #{mlp_forward.1} parent=1 // pred_region
      _
    $region29: #{mlp_forward.1} parent=1 // pred_fallthru
      _
    // Predicated region
    $region30: #{mlp_forward.1} parent=1 // pred_check
      _
    $region31: #{mlp_forward.1} parent=1 // pred_check_branch
      %37 = sbr.rel (0) target = $region33
    $region32: #{mlp_forward.1} parent=1 // pred_region
      %38 = dma.done [#allocation3], 128
    $region33: #{mlp_forward.1} parent=1 // pred_fallthru
      _
    %v39 = vld [vmem:[#allocation2] sm:$0xff]
    %v40 = vld [vmem:[%s1] sm:$0xff]
    %v41 = vld [vmem:[%s1 + $0x8] sm:$0xff]
    %v42 = vld [vmem:[%s2] sm:$0x1]
    %v44 = vlaneseq
    %v45 = vshrl.u32 %v44, 7
    %v46 = vsub.s32 0, %v45
    %v47 = vrot.slane %v42, %v46
    %vm49 = vcmask 130048
    %v51 = vsel %vm49, %v39, 0
    %53 = vmatprep.subr.mxu0 0.0
    %54 = vmatpush1.msra.mxu0 %v40
    %55 = vmatprep.subr.mxu0 0.0
    %56 = vmatpush1.msra.mxu0 %v41
    %57 = vmatprep.subr.mxu0 0.0
    %58 = vmatpush1.msra.mxu0 0.0
    %59 = vmatprep.subr.mxu0 0.0
    %60 = vmatpush1.msra.mxu0 0.0
    %61 = vmatprep.subr.mxu0 0.0
    %62 = vmatpush1.msra.mxu0 0.0
    %63 = vmatprep.subr.mxu0 0.0
    %64 = vmatpush1.msra.mxu0 0.0
    %65 = vmatprep.subr.mxu0 0.0
    %66 = vmatpush1.msra.mxu0 0.0
    %67 = vmatprep.subr.mxu0 0.0
    %68 = vmatpush1.msra.mxu0 0.0
    %69 = vmatprep.subr.mxu0 0.0
    %70 = vmatpush1.msra.mxu0 0.0
    %71 = vmatprep.subr.mxu0 0.0
    %72 = vmatpush1.msra.mxu0 0.0
    %73 = vmatprep.subr.mxu0 0.0
    %74 = vmatpush1.msra.mxu0 0.0
    %75 = vmatprep.subr.mxu0 0.0
    %76 = vmatpush1.msra.mxu0 0.0
    %77 = vmatprep.subr.mxu0 0.0
    %78 = vmatpush1.msra.mxu0 0.0
    %79 = vmatprep.subr.mxu0 0.0
    %80 = vmatpush1.msra.mxu0 0.0
    %81 = vmatprep.subr.mxu0 0.0
    %82 = vmatpush1.msra.mxu0 0.0
    %83 = vmatprep.subr.mxu0 0.0
    %84 = vmatpush1.msra.mxu0 0.0
    %85 = vmatprep.subr.mxu0 0.0
    %86 = vmatpush1.msra.mxu0 0.0
    %87 = vmatprep.subr.mxu0 0.0
    %88 = vmatpush1.msra.mxu0 0.0
    %89 = vmatprep.subr.mxu0 0.0
    %90 = vmatpush1.msra.mxu0 0.0
    %91 = vmatprep.subr.mxu0 0.0
    %92 = vmatpush1.msra.mxu0 0.0
    %93 = vmatprep.subr.mxu0 0.0
    %94 = vmatpush1.msra.mxu0 0.0
    %95 = vmatprep.subr.mxu0 0.0
    %96 = vmatpush1.msra.mxu0 0.0
    %97 = vmatprep.subr.mxu0 0.0
    %98 = vmatpush1.msra.mxu0 0.0
    %99 = vmatprep.subr.mxu0 0.0
    %100 = vmatpush1.msra.mxu0 0.0
    %101 = vmatprep.subr.mxu0 0.0
    %102 = vmatpush1.msra.mxu0 0.0
    %103 = vmatprep.subr.mxu0 0.0
    %104 = vmatpush1.msra.mxu0 0.0
    %105 = vmatprep.subr.mxu0 0.0
    %106 = vmatpush1.msra.mxu0 0.0
    %107 = vmatprep.subr.mxu0 0.0
    %108 = vmatpush1.msra.mxu0 0.0
    %109 = vmatprep.subr.mxu0 0.0
    %110 = vmatpush1.msra.mxu0 0.0
    %111 = vmatprep.subr.mxu0 0.0
    %112 = vmatpush1.msra.mxu0 0.0
    %113 = vmatprep.subr.mxu0 0.0
    %114 = vmatpush1.msra.mxu0 0.0
    %115 = vmatprep.subr.mxu0 0.0
    %116 = vmatpush1.msra.mxu0 0.0
    %117 = vmatprep.mubr.f32.mxu0 0.0
    %118 = vmatmul.mubr.f32.gmra.mrb[0].mxu0 %v51
    %v119 = vpop.f32.mrb[0].mxu0
    %v120 = vadd.f32 %v47, %v119
    %v121 = vpop.f32.mrb[0].mxu0
    %122 = vdwg.mxu0
    %vm123 = vcmp.gt.f32.partialorder %v120, 0.0
    %v124 = vmul.f32 %v120, 0.01
    %v125 = vsel %vm123, %v120, %v124
    %v126 = vld [vmem:[%s3] sm:$0xff]
    %v127 = vld [vmem:[%s3 + $0x8] sm:$0xff]
    %v128 = vld [vmem:[%s3 + $0x10] sm:$0xff]
    %v129 = vld [vmem:[%s3 + $0x18] sm:$0xff]
    %v130 = vld [vmem:[%s3 + $0x20] sm:$0xff]
    %v131 = vld [vmem:[%s3 + $0x28] sm:$0xff]
    %v132 = vld [vmem:[%s3 + $0x30] sm:$0xff]
    %v133 = vld [vmem:[%s3 + $0x38] sm:$0xff]
    %v134 = vld [vmem:[%s3 + $0x40] sm:$0xff]
    %v135 = vld [vmem:[%s3 + $0x48] sm:$0xff]
    %v136 = vld [vmem:[%s3 + $0x50] sm:$0xff]
    %v137 = vld [vmem:[%s3 + $0x58] sm:$0xff]
    %v138 = vld [vmem:[%s3 + $0x60] sm:$0xff]
    %v139 = vld [vmem:[%s3 + $0x68] sm:$0xff]
    %v140 = vld [vmem:[%s3 + $0x70] sm:$0xff]
    %v141 = vld [vmem:[%s3 + $0x78] sm:$0xff]
    %v142 = vld [vmem:[%s4] sm:$0x1]
    %v144 = vlaneseq
    %v145 = vshrl.u32 %v144, 7
    %v146 = vsub.s32 0, %v145
    %v147 = vrot.slane %v142, %v146
    %149 = vmatprep.subr.mxu0 0.0
    %150 = vmatpush1.msra.mxu0 %v126
    %151 = vmatprep.subr.mxu0 0.0
    %152 = vmatpush1.msra.mxu0 %v127
    %153 = vmatprep.subr.mxu0 0.0
    %154 = vmatpush1.msra.mxu0 %v128
    %155 = vmatprep.subr.mxu0 0.0
    %156 = vmatpush1.msra.mxu0 %v129
    %157 = vmatprep.subr.mxu0 0.0
    %158 = vmatpush1.msra.mxu0 %v130
    %159 = vmatprep.subr.mxu0 0.0
    %160 = vmatpush1.msra.mxu0 %v131
    %161 = vmatprep.subr.mxu0 0.0
    %162 = vmatpush1.msra.mxu0 %v132
    %163 = vmatprep.subr.mxu0 0.0
    %164 = vmatpush1.msra.mxu0 %v133
    %165 = vmatprep.subr.mxu0 0.0
    %166 = vmatpush1.msra.mxu0 %v134
    %167 = vmatprep.subr.mxu0 0.0
    %168 = vmatpush1.msra.mxu0 %v135
    %169 = vmatprep.subr.mxu0 0.0
    %170 = vmatpush1.msra.mxu0 %v136
    %171 = vmatprep.subr.mxu0 0.0
    %172 = vmatpush1.msra.mxu0 %v137
    %173 = vmatprep.subr.mxu0 0.0
    %174 = vmatpush1.msra.mxu0 %v138
    %175 = vmatprep.subr.mxu0 0.0
    %176 = vmatpush1.msra.mxu0 %v139
    %177 = vmatprep.subr.mxu0 0.0
    %178 = vmatpush1.msra.mxu0 %v140
    %179 = vmatprep.subr.mxu0 0.0
    %180 = vmatpush1.msra.mxu0 %v141
    %181 = vmatprep.subr.mxu0 0.0
    %182 = vmatpush1.msra.mxu0 0.0
    %183 = vmatprep.subr.mxu0 0.0
    %184 = vmatpush1.msra.mxu0 0.0
    %185 = vmatprep.subr.mxu0 0.0
    %186 = vmatpush1.msra.mxu0 0.0
    %187 = vmatprep.subr.mxu0 0.0
    %188 = vmatpush1.msra.mxu0 0.0
    %189 = vmatprep.subr.mxu0 0.0
    %190 = vmatpush1.msra.mxu0 0.0
    %191 = vmatprep.subr.mxu0 0.0
    %192 = vmatpush1.msra.mxu0 0.0
    %193 = vmatprep.subr.mxu0 0.0
    %194 = vmatpush1.msra.mxu0 0.0
    %195 = vmatprep.subr.mxu0 0.0
    %196 = vmatpush1.msra.mxu0 0.0
    %197 = vmatprep.subr.mxu0 0.0
    %198 = vmatpush1.msra.mxu0 0.0
    %199 = vmatprep.subr.mxu0 0.0
    %200 = vmatpush1.msra.mxu0 0.0
    %201 = vmatprep.subr.mxu0 0.0
    %202 = vmatpush1.msra.mxu0 0.0
    %203 = vmatprep.subr.mxu0 0.0
    %204 = vmatpush1.msra.mxu0 0.0
    %205 = vmatprep.subr.mxu0 0.0
    %206 = vmatpush1.msra.mxu0 0.0
    %207 = vmatprep.subr.mxu0 0.0
    %208 = vmatpush1.msra.mxu0 0.0
    %209 = vmatprep.subr.mxu0 0.0
    %210 = vmatpush1.msra.mxu0 0.0
    %211 = vmatprep.subr.mxu0 0.0
    %212 = vmatpush1.msra.mxu0 0.0
    %213 = vmatprep.mubr.f32.mxu0 0.0
    %214 = vmatmul.mubr.f32.gmra.mrb[0].mxu0 %v125
    %v215 = vpop.f32.mrb[0].mxu0
    %v216 = vadd.f32 %v147, %v215
    %v217 = vpop.f32.mrb[0].mxu0
    %218 = vdwg.mxu0
    %vm219 = vcmp.gt.f32.partialorder %v216, 0.0
    %v220 = vmul.f32 %v216, 0.01
    %v221 = vsel %vm219, %v216, %v220
    %v222 = vld [vmem:[%s5] sm:$0xff]
    %v223 = vld [vmem:[%s5 + $0x8] sm:$0xff]
    %v224 = vld [vmem:[%s5 + $0x10] sm:$0xff]
    %v225 = vld [vmem:[%s5 + $0x18] sm:$0xff]
    %v226 = vld [vmem:[%s5 + $0x20] sm:$0xff]
    %v227 = vld [vmem:[%s5 + $0x28] sm:$0xff]
    %v228 = vld [vmem:[%s5 + $0x30] sm:$0xff]
    %v229 = vld [vmem:[%s5 + $0x38] sm:$0xff]
    %v230 = vld [vmem:[%s5 + $0x40] sm:$0xff]
    %v231 = vld [vmem:[%s5 + $0x48] sm:$0xff]
    %v232 = vld [vmem:[%s5 + $0x50] sm:$0xff]
    %v233 = vld [vmem:[%s5 + $0x58] sm:$0xff]
    %v234 = vld [vmem:[%s5 + $0x60] sm:$0xff]
    %v235 = vld [vmem:[%s5 + $0x68] sm:$0xff]
    %v236 = vld [vmem:[%s5 + $0x70] sm:$0xff]
    %v237 = vld [vmem:[%s5 + $0x78] sm:$0xff]
    %v238 = vld [vmem:[%s6] sm:$0x1]
    %v240 = vlaneseq
    %v241 = vshrl.u32 %v240, 7
    %v242 = vsub.s32 0, %v241
    %v243 = vrot.slane %v238, %v242
    %245 = vmatprep.subr.mxu0 0.0
    %246 = vmatpush1.msra.mxu0 %v222
    %247 = vmatprep.subr.mxu0 0.0
    %248 = vmatpush1.msra.mxu0 %v223
    %249 = vmatprep.subr.mxu0 0.0
    %250 = vmatpush1.msra.mxu0 %v224
    %251 = vmatprep.subr.mxu0 0.0
    %252 = vmatpush1.msra.mxu0 %v225
    %253 = vmatprep.subr.mxu0 0.0
    %254 = vmatpush1.msra.mxu0 %v226
    %255 = vmatprep.subr.mxu0 0.0
    %256 = vmatpush1.msra.mxu0 %v227
    %257 = vmatprep.subr.mxu0 0.0
    %258 = vmatpush1.msra.mxu0 %v228
    %259 = vmatprep.subr.mxu0 0.0
    %260 = vmatpush1.msra.mxu0 %v229
    %261 = vmatprep.subr.mxu0 0.0
    %262 = vmatpush1.msra.mxu0 %v230
    %263 = vmatprep.subr.mxu0 0.0
    %264 = vmatpush1.msra.mxu0 %v231
    %265 = vmatprep.subr.mxu0 0.0
    %266 = vmatpush1.msra.mxu0 %v232
    %267 = vmatprep.subr.mxu0 0.0
    %268 = vmatpush1.msra.mxu0 %v233
    %269 = vmatprep.subr.mxu0 0.0
    %270 = vmatpush1.msra.mxu0 %v234
    %271 = vmatprep.subr.mxu0 0.0
    %272 = vmatpush1.msra.mxu0 %v235
    %273 = vmatprep.subr.mxu0 0.0
    %274 = vmatpush1.msra.mxu0 %v236
    %275 = vmatprep.subr.mxu0 0.0
    %276 = vmatpush1.msra.mxu0 %v237
    %277 = vmatprep.subr.mxu0 0.0
    %278 = vmatpush1.msra.mxu0 0.0
    %279 = vmatprep.subr.mxu0 0.0
    %280 = vmatpush1.msra.mxu0 0.0
    %281 = vmatprep.subr.mxu0 0.0
    %282 = vmatpush1.msra.mxu0 0.0
    %283 = vmatprep.subr.mxu0 0.0
    %284 = vmatpush1.msra.mxu0 0.0
    %285 = vmatprep.subr.mxu0 0.0
    %286 = vmatpush1.msra.mxu0 0.0
    %287 = vmatprep.subr.mxu0 0.0
    %288 = vmatpush1.msra.mxu0 0.0
    %289 = vmatprep.subr.mxu0 0.0
    %290 = vmatpush1.msra.mxu0 0.0
    %291 = vmatprep.subr.mxu0 0.0
    %292 = vmatpush1.msra.mxu0 0.0
    %293 = vmatprep.subr.mxu0 0.0
    %294 = vmatpush1.msra.mxu0 0.0
    %295 = vmatprep.subr.mxu0 0.0
    %296 = vmatpush1.msra.mxu0 0.0
    %297 = vmatprep.subr.mxu0 0.0
    %298 = vmatpush1.msra.mxu0 0.0
    %299 = vmatprep.subr.mxu0 0.0
    %300 = vmatpush1.msra.mxu0 0.0
    %301 = vmatprep.subr.mxu0 0.0
    %302 = vmatpush1.msra.mxu0 0.0
    %303 = vmatprep.subr.mxu0 0.0
    %304 = vmatpush1.msra.mxu0 0.0
    %305 = vmatprep.subr.mxu0 0.0
    %306 = vmatpush1.msra.mxu0 0.0
    %307 = vmatprep.subr.mxu0 0.0
    %308 = vmatpush1.msra.mxu0 0.0
    %309 = vmatprep.mubr.f32.mxu0 0.0
    %310 = vmatmul.mubr.f32.gmra.mrb[0].mxu0 %v221
    %v311 = vpop.f32.mrb[0].mxu0
    %v312 = vadd.f32 %v243, %v311
    %v313 = vpop.f32.mrb[0].mxu0
    %314 = vdwg.mxu0
    %v315 = vsub.f32 0.0, %v312
    %v316 = vmul.f32 %v315, 1.442695
    %v317 = vpow.pop %v316
    %v318 = vadd.f32 %v317, 1.0
    %v319 = vrcp.pop %v318
    %320 = vst.msk [vmem:[#allocation5] sm:$0xff] %vm49, %v319
    // Predicated region
    $region34: #{mlp_forward.1} parent=1 // pred_check
      _
    $region35: #{mlp_forward.1} parent=1 // pred_check_branch
      %322 = sbr.rel (0) target = $region37
    $region36: #{mlp_forward.1} parent=1 // pred_region
      %s324 = ssub.s32 128, 128
      %325 = vsyncadd [#allocation4], %s324
      %s327 = sshll.u32 [#allocation5], 4
      %s328 = int_to_ptr.vmem [resolvable:$true] %s327
      %330 = dma.vmem_to_hbm [thread:$0]  %s328, 128, %s7, [#allocation4]
    $region37: #{mlp_forward.1} parent=1 // pred_fallthru
      _
    // Predicated region
    $region38: #{mlp_forward.1} parent=1 // pred_check
      _
    $region39: #{mlp_forward.1} parent=1 // pred_check_branch
      %332 = sbr.rel (0) target = $region41
    $region40: #{mlp_forward.1} parent=1 // pred_region
      %333 = dma.done [#allocation4], 128
    $region41: #{mlp_forward.1} parent=1 // pred_fallthru
      _
    %334 = vsyncpa [#allocation3], 1
    %335 = vsyncpa [#allocation4], 1

</llo_original>
